<compile_context>
chip_gen: v5e
topology: v5e:2x2
jax: 0.10.0
libtpu: 0.0.40
codegen_flags: <defaults>
</compile_context>

<pallas_src>
import functools

import jax
import jax.numpy as jnp
from jax.experimental import pallas as pl
from jax.experimental.pallas import tpu as pltpu


# ------------------------ hardware-aware sizing helpers ------------------------

_VMEM_CAP = None


def _vmem_capacity_bytes():
    """Physical VMEM of the local TPU; conservative (v7x, 64 MiB) if the query fails."""
    global _VMEM_CAP
    if _VMEM_CAP is None:
        cap = 64 << 20
        try:
            info = pltpu.get_tpu_info()
            queried = int(getattr(info, "vmem_capacity_bytes", 0) or 0)
            if queried > 0:
                cap = queried
        except Exception:
            pass
        _VMEM_CAP = cap
    return _VMEM_CAP


def _vmem_budget_bytes():
    return int(0.75 * _vmem_capacity_bytes())


def _target_tile_bytes():
    """Row-tile byte target: 8 MiB on 128-MiB-VMEM chips (v5e/v6e), 4 MiB on v7x."""
    return (8 << 20) if _vmem_capacity_bytes() >= (96 << 20) else (4 << 20)


def _clamp_vmem(need_bytes):
    return int(min(max(need_bytes, 16 << 20), _vmem_budget_bytes()))


def _sublane(itemsize):
    return {4: 8, 2: 16, 1: 32}.get(itemsize, 8)


def _row_tile(n_rows, d, itemsize, target_bytes, max_rows=4096, min_rows=8):
    """Row tile: multiple of the sublane packing, ~target_bytes of streamed data per tile."""
    sub = _sublane(itemsize)
    tn = max(sub, target_bytes // max(1, d * itemsize))
    tn = max(int(tn), int(min_rows))
    tn = min(tn, int(max_rows))
    tn = (tn // sub) * sub
    tn = max(tn, sub)
    if tn >= n_rows:
        return n_rows          # full-extent block is always a legal BlockSpec
    return tn


def _const_spec(shape, index_map):
    """BlockSpec for a grid-constant input: single-buffered to halve its VMEM footprint."""
    buffered = getattr(pl, "Buffered", None)
    if buffered is not None:
        try:
            return pl.BlockSpec(shape, index_map, pipeline_mode=buffered(1))
        except TypeError:
            pass
    return pl.BlockSpec(shape, index_map)


# ------------------------ Pallas kernels ------------------------

def _layernorm_rows(x_f32, a_ref, b_ref, eps):
    """torch-LayerNorm-with-std semantics on a (TN, D) f32 tile."""
    d = x_f32.shape[-1]
    mean = jnp.mean(x_f32, axis=-1, keepdims=True)
    diff = x_f32 - mean
    var = jnp.sum(diff * diff, axis=-1, keepdims=True) / (d - 1)    # torch.std: unbiased
    inv = pl.reciprocal(jnp.sqrt(var) + eps, approx=False)          # exact (tight tolerance)
    scale = a_ref[...].astype(jnp.float32) * inv                    # fold a_2 * 1/(std+eps)
    return diff * scale + b_ref[...].astype(jnp.float32)


def _layernorm_kernel(eps, x_ref, a_ref, b_ref, o_ref):
    y = _layernorm_rows(x_ref[...].astype(jnp.float32), a_ref, b_ref, eps)
    o_ref[...] = y.astype(o_ref.dtype)


def _fused_ln_linear_res_kernel(eps, activation, x_ref, a_ref, b_ref, w_ref, bias_ref, o_ref):
    # o = x + act(LayerNorm(x) @ W + bias); MXU runs in the input dtype (bf16 stays bf16).
    x = x_ref[...]
    y = _layernorm_rows(x.astype(jnp.float32), a_ref, b_ref, eps)
    out = jnp.dot(y.astype(x_ref.dtype), w_ref[...], preferred_element_type=jnp.float32)
    out = out + bias_ref[...].astype(jnp.float32)
    if activation is not None:
        out = activation(out)
    out = x.astype(jnp.float32) + out
    o_ref[...] = out.astype(o_ref.dtype)


def _fused_ln_linear_res_coltile_kernel(eps, activation, xf_ref, xc_ref, a_ref, b_ref,
                                        w_ref, bias_ref, o_ref, y_ref):
    # Column-tiled W: grid axis j sweeps (D, TNO) column blocks of W.  Normalized rows are
    # computed once per row tile (j == 0) into VMEM scratch and reused for every column.
    @pl.when(pl.program_id(1) == 0)
    def _():
        y = _layernorm_rows(xf_ref[...].astype(jnp.float32), a_ref, b_ref, eps)
        y_ref[...] = y.astype(y_ref.dtype)

    out = jnp.dot(y_ref[...], w_ref[...], preferred_element_type=jnp.float32)
    out = out + bias_ref[...].astype(jnp.float32)
    if activation is not None:
        out = activation(out)
    out = xc_ref[...].astype(jnp.float32) + out
    o_ref[...] = out.astype(o_ref.dtype)


# ------------------------ wrappers ------------------------

def pallas_layernorm(x2d, a_2, b_2, eps=1e-6):
    """x2d: (N, D); a_2, b_2: (D,).  Row-tiled LayerNorm (torch.std semantics)."""
    n, d = x2d.shape
    assert d > 1, "unbiased std needs at least 2 features"
    itemsize = jnp.dtype(x2d.dtype).itemsize
    tn = _row_tile(n, d, itemsize, _target_tile_bytes())
    tile = tn * d * itemsize
    # streamed (x tile + out tile) are double-buffered; params resident; f32 temps ~4x tile
    need = 2 * (2 * tile) + 2 * d * 4 + 4 * tn * d * 4 + (4 << 20)
    return pl.pallas_call(
        functools.partial(_layernorm_kernel, eps),
        out_shape=jax.ShapeDtypeStruct((n, d), x2d.dtype),
        grid=(pl.cdiv(n, tn),),
        in_specs=[
            pl.BlockSpec((tn, d), lambda i: (i, 0)),
            _const_spec((1, d), lambda i: (0, 0)),
            _const_spec((1, d), lambda i: (0, 0)),
        ],
        out_specs=pl.BlockSpec((tn, d), lambda i: (i, 0)),
        compiler_params=pltpu.CompilerParams(
            dimension_semantics=("parallel",),
            vmem_limit_bytes=_clamp_vmem(need),
        ),
    )(x2d, a_2.reshape(1, d), b_2.reshape(1, d))


def sublayer_connection(x, sublayer, a_2, b_2, eps=1e-6):
    """General path: x + sublayer(LayerNorm(x)) for an arbitrary JAX sublayer.

    The residual add stays in plain JAX so XLA fuses it into the sublayer's epilogue.
    For linear(+bias/activation) sublayers prefer `sublayer_connection_linear`, which
    fuses LayerNorm -> matmul -> bias -> activation -> residual into one kernel.
    """
    b, s, d = x.shape
    x2d = x.reshape(b * s, d)
    normed = pallas_layernorm(x2d, a_2, b_2, eps).reshape(b, s, d)
    return x + sublayer(normed)


def sublayer_connection_linear(x, w, a_2, b_2, eps=1e-6, bias=None, activation=None,
                               col_tile=None):
    """Fully fused path for a linear sublayer: x + act(LayerNorm(x) @ W + bias).

    Dispatches between a resident-W kernel (W kept in VMEM, single-buffered) and a
    column-tiled kernel (W streamed as (D, TNO) blocks) based on the chip's VMEM budget.
    `col_tile` forces the column-tiled path with that output-column block size.
    """
    b, s, d = x.shape
    assert d > 1, "unbiased std needs at least 2 features"
    assert w.shape == (d, d), "residual connection requires the sublayer to preserve size"
    n = b * s
    x2d = x.reshape(n, d)
    itemsize = jnp.dtype(x.dtype).itemsize
    w_item = jnp.dtype(w.dtype).itemsize
    if bias is None:
        bias = jnp.zeros((d,), dtype=x.dtype)
    a2 = a_2.reshape(1, d)
    b2 = b_2.reshape(1, d)
    bias2 = bias.reshape(1, d)

    budget = _vmem_budget_bytes()
    target = _target_tile_bytes()

    # ---- resident-W sizing: row tile floored at the MXU M dim (256) ----
    tn = _row_tile(n, d, itemsize, target, min_rows=256)
    x_tile = tn * d * itemsize
    resident = d * d * w_item + 3 * d * 4                     # W + params/bias, single-buffered
    temps = 4 * tn * d * 4 + tn * d * 4                       # LN f32 temps + f32 matmul result
    need_resident = 2 * (2 * x_tile) + resident + temps + (4 << 20)

    if col_tile is None and need_resident <= budget:
        out2d = pl.pallas_call(
            functools.partial(_fused_ln_linear_res_kernel, eps, activation),
            out_shape=jax.ShapeDtypeStruct((n, d), x.dtype),
            grid=(pl.cdiv(n, tn),),
            in_specs=[
                pl.BlockSpec((tn, d), lambda i: (i, 0)),
                _const_spec((1, d), lambda i: (0, 0)),
                _const_spec((1, d), lambda i: (0, 0)),
                _const_spec((d, d), lambda i: (0, 0)),        # W resident, single-buffered
                _const_spec((1, d), lambda i: (0, 0)),
            ],
            out_specs=pl.BlockSpec((tn, d), lambda i: (i, 0)),
            compiler_params=pltpu.CompilerParams(
                dimension_semantics=("parallel",),
                vmem_limit_bytes=_clamp_vmem(need_resident),
            ),
        )(x2d, a2, b2, w, bias2)
        return out2d.reshape(b, s, d)

    # ---- column-tiled path (large D / v7x) ----
    if col_tile is not None:
        tno = int(col_tile)
    else:
        tno = min(512, d)
        tno = max(128, (tno // 128) * 128)
    tno = min(tno, d)

    sub = _sublane(itemsize)
    tn = _row_tile(n, d, itemsize, target, min_rows=256)

    def col_need(tn_):
        streamed = 2 * tn_ * tno * itemsize + tn_ * d * itemsize + d * tno * w_item
        resident_ = tn_ * d * itemsize + 3 * d * 4            # y scratch + params/bias
        temps_ = 4 * tn_ * d * 4 + tn_ * tno * 4
        return 2 * streamed + resident_ + temps_ + (4 << 20)

    while col_need(tn) > budget and tn > sub:
        tn = max(sub, ((tn // 2) // sub) * sub)

    out2d = pl.pallas_call(
        functools.partial(_fused_ln_linear_res_coltile_kernel, eps, activation),
        out_shape=jax.ShapeDtypeStruct((n, d), x.dtype),
        grid=(pl.cdiv(n, tn), pl.cdiv(d, tno)),
        in_specs=[
            pl.BlockSpec((tn, d), lambda i, j: (i, 0)),       # full rows for LayerNorm
            pl.BlockSpec((tn, tno), lambda i, j: (i, j)),     # residual column slice of x
            _const_spec((1, d), lambda i, j: (0, 0)),
            _const_spec((1, d), lambda i, j: (0, 0)),
            pl.BlockSpec((d, tno), lambda i, j: (0, j)),      # W column block (streamed)
            pl.BlockSpec((1, tno), lambda i, j: (0, j)),
        ],
        out_specs=pl.BlockSpec((tn, tno), lambda i, j: (i, j)),
        scratch_shapes=[pltpu.VMEM((tn, d), x.dtype)],        # normalized rows, input dtype
        compiler_params=pltpu.CompilerParams(
            dimension_semantics=("parallel", "arbitrary"),
            vmem_limit_bytes=_clamp_vmem(col_need(tn)),
        ),
    )(x2d, x2d, a2, b2, w, bias2)
    return out2d.reshape(b, s, d)


# ------------------------ demo ------------------------

if __name__ == "__main__":
    key = jax.random.PRNGKey(0)
    B, S, D = 2, 8, 128          # D multiple of 128 -> lane-dense, unmasked stores
    eps = 1e-6
    hp = jax.lax.Precision.HIGHEST

    keys = jax.random.split(key, 8)
    x = jax.random.normal(keys[0], (B, S, D), dtype=jnp.float32)
    a_2 = 1.0 + 0.05 * jax.random.normal(keys[1], (D,), dtype=jnp.float32)
    b_2 = 0.05 * jax.random.normal(keys[2], (D,), dtype=jnp.float32)
    W = 0.05 * jax.random.normal(keys[3], (D, D), dtype=jnp.float32)
    bias = 0.05 * jax.random.normal(keys[4], (D,), dtype=jnp.float32)

    def ref_layernorm(xx, a2, b2):
        d = xx.shape[-1]
        mean = jnp.mean(xx, axis=-1, keepdims=True)
        var = jnp.sum((xx - mean) ** 2, axis=-1, keepdims=True) / (d - 1)   # torch.std
        return a2 * (xx - mean) / (jnp.sqrt(var) + eps) + b2

    # 1) LayerNorm kernel alone (tight tolerance; no matmul involved).
    ln = pallas_layernorm(x.reshape(-1, D), a_2, b_2, eps).reshape(B, S, D)
    ln_ref = ref_layernorm(x, a_2, b_2)
    assert jnp.allclose(ln, ln_ref, atol=1e-4, rtol=1e-4), "layernorm mismatch"

    # 2) General path with an arbitrary JAX sublayer (linear + bias).
    sublayer = lambda h: jnp.einsum("bsd,de->bse", h, W, precision=hp) + bias
    out_general = sublayer_connection(x, sublayer, a_2, b_2, eps)
    ref = x + jnp.einsum("bsd,de->bse", ln_ref, W, precision=hp) + bias
    assert jnp.allclose(out_general, ref, atol=2e-3, rtol=2e-3), "general path mismatch"

    # 3) Fully fused resident-W path (f32 MXU dot).
    out_fused = sublayer_connection_linear(x, W, a_2, b_2, eps, bias=bias)
    assert jnp.allclose(out_fused, ref, atol=2e-3, rtol=2e-3), "fused path mismatch"

    # 4) bf16 inputs exercise the bf16-MXU path (matmul in the input dtype).
    xb, Wb, biasb = (t.astype(jnp.bfloat16) for t in (x, W, bias))
    out_bf16 = sublayer_connection_linear(xb, Wb, a_2, b_2, eps, bias=biasb)
    ref_b = (xb.astype(jnp.float32)
             + jnp.einsum("bsd,de->bse", ref_layernorm(xb.astype(jnp.float32), a_2, b_2),
                          Wb.astype(jnp.float32), precision=hp)
             + biasb.astype(jnp.float32))
    assert jnp.allclose(out_bf16.astype(jnp.float32), ref_b, atol=1e-1, rtol=1e-1), \
        "bf16 fused path mismatch"

    # 5) Column-tiled W path (the large-D / v7x variant), forced at small scale,
    #    with a tanh epilogue standing in for a nonlinear linear-sublayer.
    D2 = 256
    x2 = jax.random.normal(keys[5], (B, S, D2), dtype=jnp.float32)
    a22 = 1.0 + 0.05 * jax.random.normal(keys[6], (D2,), dtype=jnp.float32)
    b22 = jnp.zeros((D2,), dtype=jnp.float32)
    W2 = 0.05 * jax.random.normal(keys[7], (D2, D2), dtype=jnp.float32)
    out_ct = sublayer_connection_linear(x2, W2, a22, b22, eps,
                                        activation=jnp.tanh, col_tile=128)
    ref_ct = x2 + jnp.tanh(jnp.einsum("bsd,de->bse", ref_layernorm(x2, a22, b22),
                                      W2, precision=hp))
    assert jnp.allclose(out_ct, ref_ct, atol=2e-3, rtol=2e-3), "column-tiled path mismatch"

    jax.block_until_ready((ln, out_general, out_fused, out_bf16, out_ct))
    print("KERNEL_OK")
</pallas_src>

<mosaic_0001>
module attributes {stable_mosaic.version = 11 : i64} {
  func.func @_layernorm_kernel(%arg0: i32, %arg1: memref<16x128xf32, #tpu.memory_space<vmem>>, %arg2: memref<1x128xf32, #tpu.memory_space<vmem>>, %arg3: memref<1x128xf32, #tpu.memory_space<vmem>>, %arg4: memref<16x128xf32, #tpu.memory_space<vmem>>) attributes {dimension_semantics = [#tpu.dimension_semantics<parallel>], iteration_bounds = array<i64: 1>, scalar_prefetch = 0 : i64, scratch_operands = 0 : i64, tpu.core_type = #tpu.core_type<tc>, window_params = [{transform_indices = @transform_0, window_bounds = array<i64: 16, 128>}, {pipeline_mode = #tpu.pipeline_mode<synchronous>, transform_indices = @transform_1, window_bounds = array<i64: 1, 128>}, {pipeline_mode = #tpu.pipeline_mode<synchronous>, transform_indices = @transform_2, window_bounds = array<i64: 1, 128>}, {transform_indices = @transform_3, window_bounds = array<i64: 16, 128>}]} {
    %c0 = arith.constant 0 : index
    %c0_0 = arith.constant 0 : index
    %0 = vector.load %arg1[%c0, %c0_0] : memref<16x128xf32, #tpu.memory_space<vmem>>, vector<16x128xf32>
    %cst = arith.constant dense<0.000000e+00> : vector<16xf32>
    %1 = vector.multi_reduction <add>, %0, %cst [1] : vector<16x128xf32> to vector<16xf32>
    %2 = vector.shape_cast %1 : vector<16xf32> to vector<16x1xf32>
    %cst_1 = arith.constant 1.280000e+02 : f32
    %3 = vector.broadcast %cst_1 : f32 to vector<16x1xf32>
    %4 = arith.divf %2, %3 : vector<16x1xf32>
    %5 = vector.broadcast %4 : vector<16x1xf32> to vector<16x128xf32>
    %6 = arith.subf %0, %5 : vector<16x128xf32>
    %7 = arith.mulf %6, %6 : vector<16x128xf32>
    %cst_2 = arith.constant dense<0.000000e+00> : vector<16xf32>
    %8 = vector.multi_reduction <add>, %7, %cst_2 [1] : vector<16x128xf32> to vector<16xf32>
    %9 = vector.shape_cast %8 : vector<16xf32> to vector<16x1xf32>
    %cst_3 = arith.constant 1.270000e+02 : f32
    %10 = vector.broadcast %cst_3 : f32 to vector<16x1xf32>
    %11 = arith.divf %9, %10 : vector<16x1xf32>
    %12 = math.sqrt %11 : vector<16x1xf32>
    %cst_4 = arith.constant 9.99999997E-7 : f32
    %13 = vector.broadcast %cst_4 : f32 to vector<16x1xf32>
    %14 = arith.addf %12, %13 : vector<16x1xf32>
    %15 = tpu.reciprocal %14 : vector<16x1xf32> -> vector<16x1xf32>
    %c0_5 = arith.constant 0 : index
    %c0_6 = arith.constant 0 : index
    %16 = vector.load %arg2[%c0_5, %c0_6] : memref<1x128xf32, #tpu.memory_space<vmem>>, vector<1x128xf32>
    %17 = vector.broadcast %16 : vector<1x128xf32> to vector<16x128xf32>
    %18 = vector.broadcast %15 : vector<16x1xf32> to vector<16x128xf32>
    %19 = arith.mulf %17, %18 : vector<16x128xf32>
    %20 = arith.mulf %6, %19 : vector<16x128xf32>
    %c0_7 = arith.constant 0 : index
    %c0_8 = arith.constant 0 : index
    %21 = vector.load %arg3[%c0_7, %c0_8] : memref<1x128xf32, #tpu.memory_space<vmem>>, vector<1x128xf32>
    %22 = vector.broadcast %21 : vector<1x128xf32> to vector<16x128xf32>
    %23 = arith.addf %20, %22 : vector<16x128xf32>
    %c0_9 = arith.constant 0 : index
    %c0_10 = arith.constant 0 : index
    %24 = vector.load %arg4[%c0_9, %c0_10] : memref<16x128xf32, #tpu.memory_space<vmem>>, vector<16x128xf32>
    tpu.vector_store %arg4[%c0_9, %c0_10], %23 {strides = array<i32>} : memref<16x128xf32, #tpu.memory_space<vmem>>, vector<16x128xf32>,
    return
  }
  func.func @transform_0(%arg0: i32) -> (i32, i32) {
    %c0_i32 = arith.constant 0 : i32
    %c0_i32_0 = arith.constant 0 : i32
    return %arg0, %c0_i32 : i32, i32
  }
  func.func @transform_1(%arg0: i32) -> (i32, i32) {
    %c0_i32 = arith.constant 0 : i32
    %c0_i32_0 = arith.constant 0 : i32
    %c0_i32_1 = arith.constant 0 : i32
    return %c0_i32, %c0_i32_0 : i32, i32
  }
  func.func @transform_2(%arg0: i32) -> (i32, i32) {
    %c0_i32 = arith.constant 0 : i32
    %c0_i32_0 = arith.constant 0 : i32
    %c0_i32_1 = arith.constant 0 : i32
    return %c0_i32, %c0_i32_0 : i32, i32
  }
  func.func @transform_3(%arg0: i32) -> (i32, i32) {
    %c0_i32 = arith.constant 0 : i32
    %c0_i32_0 = arith.constant 0 : i32
    return %arg0, %c0_i32 : i32, i32
  }
}

</mosaic_0001>

<llo_original>
// kernel: tpu_custom_call.1
$region0: #{tpu_custom_call.1}
  #allocation0 [shape = 'u32[]', space=smem, size = 0x4, offset = 0x4, fixed_abs, tag = 'smem constant byte address 0x4 - core index']
  #allocation1 [shape = 'u32[72,128]{1,0:T(1,128)}', space=vmem, size = 0x9000, scoped, tag = 'internal scratch']
  %s0 = inlined_call_operand.hbm [shape: f32[16,128], index: 0, kind: input, shape index: {}]
  %s1 = inlined_call_operand.hbm [shape: f32[1,128], index: 1, kind: input, shape index: {}]
  %s2 = inlined_call_operand.vmem [shape: f32[1,128], index: 2, kind: input, shape index: {}]
  %s3 = inlined_call_operand.hbm [shape: f32[16,128], index: 3, kind: output, shape index: {}]
  %s4 = sld [smem:[#allocation0]]
  $region30: #{tpu_custom_call.1} parent=0
    _
  %s6 = ssub.s32 1, %s4
  %s7 = scalar_select 0, %s6, %s4
  $region1: #{tpu_custom_call.1} parent=0
    #allocation2 [shape = 'u8[8192]{0}', space=vmem, size = 0x2000, scoped, tag = 'input window, operand 0, single buffered']
    #allocation3 [shape = 's32[1]{0}', space=sflag, size = 0x4, scoped, tag = 'scoped memory for tpu_custom_call.1']
    #allocation4 [shape = 's32[1]{0}', space=sflag, size = 0x4, scoped, tag = 'scoped memory for tpu_custom_call.1']
    #allocation5 [shape = 'u8[512]{0}', space=vmem, size = 0x400, scoped, tag = 'input window, operand 1, single buffered']
    #allocation6 [shape = 's32[1]{0}', space=sflag, size = 0x4, scoped, tag = 'scoped memory for tpu_custom_call.1']
    #allocation7 [shape = 'u8[8192]{0}', space=vmem, size = 0x2000, scoped, tag = 'output window, operand 0, single buffered']
    %8 = vsyncpa [#allocation3], 0
    %9 = vsyncpa [#allocation6], 0
    %10 = vsyncpa [#allocation4], 0
    // Predicated region
    $region2: #{tpu_custom_call.1} parent=1 // pred_check
      _
    $region3: #{tpu_custom_call.1} parent=1 // pred_check_branch
      %12 = sbr.rel (0) target = $region5
    $region4: #{tpu_custom_call.1} parent=1 // pred_region
      %14 = vsyncadd [#allocation3], 0
      %s15 = sshll.u32 %s0, 4
      %s16 = int_to_ptr.hbm [resolvable:$true] %s15
      %s17 = sshll.u32 [#allocation2], 4
      %s18 = int_to_ptr.vmem [resolvable:$true] %s17
      %23 = dma.hbm_to_vmem [thread:$0]  %s16, 256, %s18, [#allocation3], 128, 128, 8
    $region5: #{tpu_custom_call.1} parent=1 // pred_fallthru
      _
    // Predicated region
    $region6: #{tpu_custom_call.1} parent=1 // pred_check
      _
    $region7: #{tpu_custom_call.1} parent=1 // pred_check_branch
      %25 = sbr.rel (0) target = $region9
    $region8: #{tpu_custom_call.1} parent=1 // pred_region
      %27 = vsyncadd [#allocation6], 0
      %s29 = sshll.u32 %s1, 4
      %s30 = int_to_ptr.hbm [resolvable:$true] %s29
      %s31 = sshll.u32 [#allocation5], 4
      %s32 = int_to_ptr.vmem [resolvable:$true] %s31
      %34 = dma.hbm_to_vmem [thread:$0]  %s30, 16, %s32, [#allocation6]
    $region9: #{tpu_custom_call.1} parent=1 // pred_fallthru
      _
    // Predicated region
    $region10: #{tpu_custom_call.1} parent=1 // pred_check
      _
    $region11: #{tpu_custom_call.1} parent=1 // pred_check_branch
      %36 = sbr.rel (0) target = $region13
    $region12: #{tpu_custom_call.1} parent=1 // pred_region
      _
    $region13: #{tpu_custom_call.1} parent=1 // pred_fallthru
      _
    // Predicated region
    $region14: #{tpu_custom_call.1} parent=1 // pred_check
      _
    $region15: #{tpu_custom_call.1} parent=1 // pred_check_branch
      %38 = sbr.rel (0) target = $region17
    $region16: #{tpu_custom_call.1} parent=1 // pred_region
      %40 = dma.done [#allocation3], 256
    $region17: #{tpu_custom_call.1} parent=1 // pred_fallthru
      _
    // Predicated region
    $region18: #{tpu_custom_call.1} parent=1 // pred_check
      _
    $region19: #{tpu_custom_call.1} parent=1 // pred_check_branch
      %42 = sbr.rel (0) target = $region21
    $region20: #{tpu_custom_call.1} parent=1 // pred_region
      %44 = dma.done [#allocation6], 16
    $region21: #{tpu_custom_call.1} parent=1 // pred_fallthru
      _
    %v45 = vld [vmem:[#allocation2] sm:$0xff]
    %v46 = vld [vmem:[#allocation2 + $0x8] sm:$0xff]
    %47 = vadd.xlane.f32.xlu0 %v45
    %v48 = vpop.xlane.xlu0 %47
    %49 = vadd.xlane.f32.xlu0 %v46
    %v50 = vpop.xlane.xlu0 %49
    %v51 = vrcp.pop 128.0
    %v52 = vmul.f32 128.0, %v51
    %v53 = vsub.f32 1.0, %v52
    %v54 = vmul.f32 %v51, %v53
    %v55 = vadd.f32 %v51, %v54
    %vm56 = vweird.f32 %v51
    %v57 = vsel %vm56, %v51, %v55
    %v58 = vmul.f32 %v48, %v57
    %v59 = vmul.f32 %v50, %v57
    %v60 = vsub.f32 %v45, %v58
    %v61 = vsub.f32 %v46, %v59
    %v62 = vmul.f32 %v60, %v60
    %v63 = vmul.f32 %v61, %v61
    %64 = vadd.xlane.f32.xlu0 %v62
    %v65 = vpop.xlane.xlu0 %64
    %66 = vadd.xlane.f32.xlu0 %v63
    %v67 = vpop.xlane.xlu0 %66
    %v68 = vrcp.pop 127.0
    %v69 = vmul.f32 127.0, %v68
    %v70 = vsub.f32 1.0, %v69
    %v71 = vmul.f32 %v68, %v70
    %v72 = vadd.f32 %v68, %v71
    %vm73 = vweird.f32 %v68
    %v74 = vsel %vm73, %v68, %v72
    %v75 = vmul.f32 %v65, %v74
    %v76 = vmul.f32 %v67, %v74
    %v77 = vrsqrt.pop %v75
    %v78 = vmul.f32 %v77, %v75
    %v79 = vmul.f32 %v78, %v77
    %v80 = vmul.f32 0.5, %v79
    %v81 = vsub.f32 1.5, %v80
    %v82 = vmul.f32 %v77, %v81
    %v83 = vmul.f32 %v75, %v82
    %vm84 = vcmp.eq.f32.partialorder %v75, inf
    %v85 = vsel %vm84, %v75, %v83
    %vm86 = vcmp.eq.f32.partialorder %v75, 0.0
    %v87 = vand.u32 %v75, 2147483648
    %v88 = vsel %vm86, %v87, %v85
    %v89 = vrsqrt.pop %v76
    %v90 = vmul.f32 %v89, %v76
    %v91 = vmul.f32 %v90, %v89
    %v92 = vmul.f32 0.5, %v91
    %v93 = vsub.f32 1.5, %v92
    %v94 = vmul.f32 %v89, %v93
    %v95 = vmul.f32 %v76, %v94
    %vm96 = vcmp.eq.f32.partialorder %v76, inf
    %v97 = vsel %vm96, %v76, %v95
    %vm98 = vcmp.eq.f32.partialorder %v76, 0.0
    %v99 = vand.u32 %v76, 2147483648
    %v100 = vsel %vm98, %v99, %v97
    %v101 = vadd.f32 %v88, 1e-06
    %v102 = vadd.f32 %v100, 1e-06
    %v103 = vrcp.pop %v101
    %v104 = vmul.f32 %v101, %v103
    %v105 = vsub.f32 1.0, %v104
    %v106 = vmul.f32 %v103, %v105
    %v107 = vadd.f32 %v103, %v106
    %vm108 = vweird.f32 %v101
    %vm109 = vweird.f32 %v103
    %vm110 = vmor %vm108, %vm109
    %v111 = vsel %vm110, %v103, %v107
    %v112 = vand.u32 2147483647, %v101
    %vm113 = vcmp.eq.f32.partialorder %v112, 8.507059e+37
    %v114 = vand.u32 %v101, 2147483648
    %v115 = vor.u32 1.1754944e-38, %v114
    %v116 = vsel %vm113, %v115, %v111
    %v117 = vrcp.pop %v102
    %v118 = vmul.f32 %v102, %v117
    %v119 = vsub.f32 1.0, %v118
    %v120 = vmul.f32 %v117, %v119
    %v121 = vadd.f32 %v117, %v120
    %vm122 = vweird.f32 %v102
    %vm123 = vweird.f32 %v117
    %vm124 = vmor %vm122, %vm123
    %v125 = vsel %vm124, %v117, %v121
    %v126 = vand.u32 2147483647, %v102
    %vm127 = vcmp.eq.f32.partialorder %v126, 8.507059e+37
    %v128 = vand.u32 %v102, 2147483648
    %v129 = vor.u32 1.1754944e-38, %v128
    %v130 = vsel %vm127, %v129, %v125
    %v131 = vld [vmem:[#allocation5] sm:$0x1]
    %v133 = vperm.slane %v131, 0
    %v135 = vmul.f32 %v133, %v116
    %v136 = vmul.f32 %v133, %v130
    %v137 = vmul.f32 %v60, %v135
    %v138 = vmul.f32 %v61, %v136
    %v139 = vld [vmem:[%s2] sm:$0x1]
    %v141 = vperm.slane %v139, 0
    %v143 = vadd.f32 %v137, %v141
    %v144 = vadd.f32 %v138, %v141
    %145 = vst [vmem:[#allocation7] sm:$0xff] %v143
    %146 = vst [vmem:[#allocation7 + $0x8] sm:$0xff] %v144
    // Predicated region
    $region22: #{tpu_custom_call.1} parent=1 // pred_check
      _
    $region23: #{tpu_custom_call.1} parent=1 // pred_check_branch
      %148 = sbr.rel (0) target = $region25
    $region24: #{tpu_custom_call.1} parent=1 // pred_region
      %150 = vsyncadd [#allocation4], 0
      %s151 = sshll.u32 [#allocation7], 4
      %s152 = int_to_ptr.vmem [resolvable:$true] %s151
      %s153 = sshll.u32 %s3, 4
      %s154 = int_to_ptr.hbm [resolvable:$true] %s153
      %159 = dma.vmem_to_hbm [thread:$0]  %s152, 256, %s154, [#allocation4], 128, 128, 8
    $region25: #{tpu_custom_call.1} parent=1 // pred_fallthru
      _
    // Predicated region
    $region26: #{tpu_custom_call.1} parent=1 // pred_check
      _
    $region27: #{tpu_custom_call.1} parent=1 // pred_check_branch
      %161 = sbr.rel (0) target = $region29
    $region28: #{tpu_custom_call.1} parent=1 // pred_region
      %163 = dma.done [#allocation4], 256
    $region29: #{tpu_custom_call.1} parent=1 // pred_fallthru
      _
    %164 = vsyncpa [#allocation3], 1
    %165 = vsyncpa [#allocation6], 1
    %166 = vsyncpa [#allocation4], 1

</llo_original>
